<compile_context>
chip_gen: v5e
topology: v5e:2x2
jax: 0.10.0
libtpu: 0.0.40
codegen_flags: <defaults>
</compile_context>

<pallas_src>
import functools

import jax
import jax.numpy as jnp
from jax.experimental import pallas as pl
from jax.experimental.pallas import tpu as pltpu


def _diversity_kernel(noise_ref, layer_ref, out_ref, gl_ref, sql_ref, *,
                      metric, n_rows, dl_true, dn_true):
    k = pl.program_id(0)

    @pl.when(k == 0)
    def _init():
        gl_ref[...] = jnp.zeros_like(gl_ref)
        sql_ref[...] = jnp.zeros_like(sql_ref)

    tile = layer_ref[...]                          # (N, TK) native dtype (f32/bf16)
    tile_f32 = tile.astype(jnp.float32)

    if metric in ("l2", "cosine"):
        # Accumulate Gram matrix on the MXU and squared norms on the VPU.
        gl_ref[...] += jnp.dot(tile, tile.T, preferred_element_type=jnp.float32)
        sql_ref[...] += jnp.sum(tile_f32 * tile_f32, axis=1, keepdims=True)
    elif metric == "l1":
        # Accumulate sum_d |x_j - x_i| without the (N, N, D) broadcast:
        # static loop over rows, (N, TK) working set, lane-axis reduce per row.
        n = gl_ref.shape[0]
        col_ids = jax.lax.broadcasted_iota(jnp.int32, (1, n), 1)   # (1, N)
        acc = jnp.zeros((n, n), jnp.float32)
        for i in range(n):                                          # N is small & static
            row = tile_f32[i:i + 1, :]                              # (1, TK)
            colsum = jnp.sum(jnp.abs(tile_f32 - row), axis=1, keepdims=True)  # (N, 1)
            acc = acc + colsum * (col_ids == i).astype(jnp.float32)           # fill col i
        gl_ref[...] += acc
    else:
        raise ValueError(f"unknown metric: {metric}")

    @pl.when(k == pl.num_programs(0) - 1)
    def _finalize():
        # Noise pairwise squared-L2 (tiny, computed exactly once).
        noises = noise_ref[...]
        noises_f32 = noises.astype(jnp.float32)
        g_n = jnp.dot(noises, noises.T, preferred_element_type=jnp.float32)
        sq_n = jnp.sum(noises_f32 * noises_f32, axis=1, keepdims=True)
        noise_dist = jnp.maximum(sq_n + sq_n.T - 2.0 * g_n, 0.0) * (1.0 / dn_true)

        if metric == "l2":
            layer_dist = jnp.maximum(
                sql_ref[...] + sql_ref[...].T - 2.0 * gl_ref[...], 0.0
            ) * (1.0 / dl_true)
        elif metric == "cosine":
            norms = jnp.sqrt(sql_ref[...])                          # (N, 1)
            denom = jnp.maximum(norms * norms.T, 1e-8)
            layer_dist = 1.0 - gl_ref[...] / denom
        else:  # l1
            layer_dist = gl_ref[...] * (1.0 / dl_true)

        total = jnp.sum(-noise_dist * layer_dist) * (1.0 / (n_rows * n_rows))
        out_ref[...] = jnp.exp(total).reshape(1, 1)


def diversity_loss(noises, layer, metric="l2", tile_k=512):
    """Pallas implementation of DiversityLoss(metric).forward(noises, layer)."""
    if layer.ndim > 2:
        layer = layer.reshape(layer.shape[0], -1)
    n, dl = layer.shape
    n2, dn = noises.shape
    assert n == n2, (n, n2)

    # Tile width: multiple of 128 lanes, capped by the (128-padded) feature dim.
    dl_128 = ((dl + 127) // 128) * 128
    tk = max(128, min(tile_k, dl_128))
    tk = (tk // 128) * 128
    dl_pad = ((dl + tk - 1) // tk) * tk
    if dl_pad != dl:
        # Zero padding contributes nothing to Gram / norms / L1 sums.
        layer = jnp.pad(layer, ((0, 0), (0, dl_pad - dl)))
    num_tiles = dl_pad // tk

    kernel = functools.partial(
        _diversity_kernel, metric=metric, n_rows=n, dl_true=dl, dn_true=dn)

    bytes_layer = n * dl_pad * jnp.dtype(layer.dtype).itemsize
    bytes_noise = n * dn * jnp.dtype(noises.dtype).itemsize
    cost = pl.CostEstimate(
        flops=int(2 * n * n * (dl_pad + dn)),
        transcendentals=1,
        bytes_accessed=int(bytes_layer + bytes_noise + 4),
    )

    out = pl.pallas_call(
        kernel,
        out_shape=jax.ShapeDtypeStruct((1, 1), jnp.float32),
        grid_spec=pltpu.PrefetchScalarGridSpec(
            num_scalar_prefetch=0,
            grid=(num_tiles,),
            in_specs=[
                pl.BlockSpec((n, dn), lambda k: (0, 0)),   # noises: VMEM-resident
                pl.BlockSpec((n, tk), lambda k: (0, k)),   # layer: streamed tiles
            ],
            out_specs=pl.BlockSpec((1, 1), lambda k: (0, 0)),
            scratch_shapes=[
                pltpu.VMEM((n, n), jnp.float32),   # Gram / L1 accumulator
                pltpu.VMEM((n, 1), jnp.float32),   # squared-norm accumulator
            ],
        ),
        compiler_params=pltpu.CompilerParams(
            dimension_semantics=("arbitrary",)),   # feature dim is a reduction
        cost_estimate=cost,
    )(noises, layer)
    return out[0, 0]


def _reference(noises, layer, metric):
    """Pure-JAX reference of the PyTorch module, for a silent sanity check."""
    if layer.ndim > 2:
        layer = layer.reshape(layer.shape[0], -1)

    def pairwise(t, how):
        t1 = t[None, :, :]          # tensor.expand((N, N, D)) -> [i, j] = t[j]
        t2 = t[:, None, :]          # tensor.unsqueeze(1)      -> [i, j] = t[i]
        if how == "l1":
            return jnp.mean(jnp.abs(t1 - t2), axis=2)
        if how == "l2":
            return jnp.mean((t1 - t2) ** 2, axis=2)
        if how == "cosine":
            num = jnp.sum(t1 * t2, axis=2)
            den = jnp.maximum(
                jnp.linalg.norm(t1, axis=2) * jnp.linalg.norm(t2, axis=2), 1e-8
            )
            return 1.0 - num / den
        raise ValueError(how)

    layer_dist = pairwise(layer, metric)
    noise_dist = pairwise(noises, "l2")
    return jnp.exp(jnp.mean(-noise_dist * layer_dist))


if __name__ == "__main__":
    key = jax.random.PRNGKey(0)
    k1, k2 = jax.random.split(key)

    N, D_NOISE = 8, 32
    C, H, W = 4, 16, 16

    noises = jax.random.normal(k1, (N, D_NOISE), dtype=jnp.float32)
    layer = jax.random.normal(k2, (N, C, H, W), dtype=jnp.float32)  # flattened inside

    # f32 path, all three metrics.
    for metric in ("l2", "l1", "cosine"):
        out = jax.block_until_ready(diversity_loss(noises, layer, metric=metric))
        ref = _reference(noises, layer, metric)
        assert jnp.allclose(out, ref, rtol=1e-3, atol=1e-5), (metric, out, ref)

    # bf16-in-HBM path (no wrapper upcast; kernel accumulates in f32).
    noises_bf16 = noises.astype(jnp.bfloat16)
    layer_bf16 = layer.astype(jnp.bfloat16)
    out_bf16 = jax.block_until_ready(
        diversity_loss(noises_bf16, layer_bf16, metric="l2"))
    ref_bf16 = _reference(noises_bf16.astype(jnp.float32),
                          layer_bf16.astype(jnp.float32), "l2")
    assert jnp.allclose(out_bf16, ref_bf16, rtol=2e-2, atol=1e-3), (out_bf16, ref_bf16)

    print("KERNEL_OK")
</pallas_src>

<mosaic_0001>
module attributes {stable_mosaic.version = 11 : i64} {
  func.func @_diversity_kernel(%arg0: i32, %arg1: memref<8x32xf32, #tpu.memory_space<vmem>>, %arg2: memref<8x512xf32, #tpu.memory_space<vmem>>, %arg3: memref<1x1xf32, #tpu.memory_space<vmem>>, %arg4: memref<8x8xf32, #tpu.memory_space<vmem>>, %arg5: memref<8x1xf32, #tpu.memory_space<vmem>>) attributes {dimension_semantics = [#tpu.dimension_semantics<arbitrary>], iteration_bounds = array<i64: 2>, scalar_prefetch = 0 : i64, scratch_operands = 2 : i64, tpu.core_type = #tpu.core_type<tc>, window_params = [{pipeline_mode = #tpu.pipeline_mode<synchronous>, transform_indices = @transform_0, window_bounds = array<i64: 8, 32>}, {transform_indices = @transform_1, window_bounds = array<i64: 8, 512>}, {pipeline_mode = #tpu.pipeline_mode<synchronous>, transform_indices = @transform_2, window_bounds = array<i64: 1, 1>}]} {
    %c0_i32 = arith.constant 0 : i32
    %0 = arith.cmpi eq, %arg0, %c0_i32 : i32
    %1 = arith.extui %0 : i1 to i32
    %c0_i32_0 = arith.constant 0 : i32
    %2 = arith.cmpi ne, %1, %c0_i32_0 : i32
    scf.if %2 {
      %cst_12 = arith.constant 0.000000e+00 : f32
      %18 = vector.broadcast %cst_12 : f32 to vector<8x8xf32>
      %c0_13 = arith.constant 0 : index
      %c0_14 = arith.constant 0 : index
      %19 = vector.load %arg4[%c0_13, %c0_14] : memref<8x8xf32, #tpu.memory_space<vmem>>, vector<8x8xf32>
      tpu.vector_store %arg4[%c0_13, %c0_14], %18 {strides = array<i32>} : memref<8x8xf32, #tpu.memory_space<vmem>>, vector<8x8xf32>,
      %cst_15 = arith.constant 0.000000e+00 : f32
      %20 = vector.broadcast %cst_15 : f32 to vector<8x1xf32>
      %c0_16 = arith.constant 0 : index
      %c0_17 = arith.constant 0 : index
      %21 = vector.load %arg5[%c0_16, %c0_17] : memref<8x1xf32, #tpu.memory_space<vmem>>, vector<8x1xf32>
      tpu.vector_store %arg5[%c0_16, %c0_17], %20 {strides = array<i32>} : memref<8x1xf32, #tpu.memory_space<vmem>>, vector<8x1xf32>,
    } else {
    }
    %c0 = arith.constant 0 : index
    %c0_1 = arith.constant 0 : index
    %3 = vector.load %arg2[%c0, %c0_1] : memref<8x512xf32, #tpu.memory_space<vmem>>, vector<8x512xf32>
    %c0_2 = arith.constant 0 : index
    %c0_3 = arith.constant 0 : index
    %4 = vector.load %arg4[%c0_2, %c0_3] : memref<8x8xf32, #tpu.memory_space<vmem>>, vector<8x8xf32>
    %5 = tpu.transpose %3, [1, 0] : vector<8x512xf32> -> vector<512x8xf32>
    %cst = arith.constant dense<0.000000e+00> : vector<8x8xf32>
    %6 = tpu.matmul %3, %5, %cst {dimension_numbers = #tpu.dot_dimension_numbers<[1], [0], [0], [1], [0, 0, 1, 1], [], []>} : vector<8x512xf32>, vector<512x8xf32>, vector<8x8xf32> -> vector<8x8xf32>
    %7 = arith.addf %4, %6 : vector<8x8xf32>
    %c0_4 = arith.constant 0 : index
    %c0_5 = arith.constant 0 : index
    %8 = vector.load %arg4[%c0_4, %c0_5] : memref<8x8xf32, #tpu.memory_space<vmem>>, vector<8x8xf32>
    tpu.vector_store %arg4[%c0_4, %c0_5], %7 {strides = array<i32>} : memref<8x8xf32, #tpu.memory_space<vmem>>, vector<8x8xf32>,
    %c0_6 = arith.constant 0 : index
    %c0_7 = arith.constant 0 : index
    %9 = vector.load %arg5[%c0_6, %c0_7] : memref<8x1xf32, #tpu.memory_space<vmem>>, vector<8x1xf32>
    %10 = arith.mulf %3, %3 : vector<8x512xf32>
    %cst_8 = arith.constant dense<0.000000e+00> : vector<8xf32>
    %11 = vector.multi_reduction <add>, %10, %cst_8 [1] : vector<8x512xf32> to vector<8xf32>
    %12 = vector.shape_cast %11 : vector<8xf32> to vector<8x1xf32>
    %13 = arith.addf %9, %12 : vector<8x1xf32>
    %c0_9 = arith.constant 0 : index
    %c0_10 = arith.constant 0 : index
    %14 = vector.load %arg5[%c0_9, %c0_10] : memref<8x1xf32, #tpu.memory_space<vmem>>, vector<8x1xf32>
    tpu.vector_store %arg5[%c0_9, %c0_10], %13 {strides = array<i32>} : memref<8x1xf32, #tpu.memory_space<vmem>>, vector<8x1xf32>,
    %c1_i32 = arith.constant 1 : i32
    %15 = arith.cmpi eq, %arg0, %c1_i32 : i32
    %16 = arith.extui %15 : i1 to i32
    %c0_i32_11 = arith.constant 0 : i32
    %17 = arith.cmpi ne, %16, %c0_i32_11 : i32
    scf.if %17 {
      %c0_12 = arith.constant 0 : index
      %c0_13 = arith.constant 0 : index
      %18 = vector.load %arg1[%c0_12, %c0_13] : memref<8x32xf32, #tpu.memory_space<vmem>>, vector<8x32xf32>
      %19 = tpu.transpose %18, [1, 0] : vector<8x32xf32> -> vector<32x8xf32>
      %cst_14 = arith.constant dense<0.000000e+00> : vector<8x8xf32>
      %20 = tpu.matmul %18, %19, %cst_14 {dimension_numbers = #tpu.dot_dimension_numbers<[1], [0], [0], [1], [0, 0, 1, 1], [], []>} : vector<8x32xf32>, vector<32x8xf32>, vector<8x8xf32> -> vector<8x8xf32>
      %21 = arith.mulf %18, %18 : vector<8x32xf32>
      %cst_15 = arith.constant dense<0.000000e+00> : vector<8xf32>
      %22 = vector.multi_reduction <add>, %21, %cst_15 [1] : vector<8x32xf32> to vector<8xf32>
      %23 = vector.shape_cast %22 : vector<8xf32> to vector<8x1xf32>
      %24 = tpu.transpose %23, [1, 0] : vector<8x1xf32> -> vector<1x8xf32>
      %25 = vector.broadcast %23 : vector<8x1xf32> to vector<8x8xf32>
      %26 = vector.broadcast %24 : vector<1x8xf32> to vector<8x8xf32>
      %27 = arith.addf %25, %26 : vector<8x8xf32>
      %cst_16 = arith.constant 2.000000e+00 : f32
      %28 = vector.broadcast %cst_16 : f32 to vector<8x8xf32>
      %29 = arith.mulf %28, %20 : vector<8x8xf32>
      %30 = arith.subf %27, %29 : vector<8x8xf32>
      %cst_17 = arith.constant 0.000000e+00 : f32
      %31 = vector.broadcast %cst_17 : f32 to vector<8x8xf32>
      %32 = arith.maximumf %30, %31 : vector<8x8xf32>
      %cst_18 = arith.constant 3.125000e-02 : f32
      %33 = vector.broadcast %cst_18 : f32 to vector<8x8xf32>
      %34 = arith.mulf %32, %33 : vector<8x8xf32>
      %c0_19 = arith.constant 0 : index
      %c0_20 = arith.constant 0 : index
      %35 = vector.load %arg5[%c0_19, %c0_20] : memref<8x1xf32, #tpu.memory_space<vmem>>, vector<8x1xf32>
      %c0_21 = arith.constant 0 : index
      %c0_22 = arith.constant 0 : index
      %36 = vector.load %arg5[%c0_21, %c0_22] : memref<8x1xf32, #tpu.memory_space<vmem>>, vector<8x1xf32>
      %37 = tpu.transpose %36, [1, 0] : vector<8x1xf32> -> vector<1x8xf32>
      %38 = vector.broadcast %35 : vector<8x1xf32> to vector<8x8xf32>
      %39 = vector.broadcast %37 : vector<1x8xf32> to vector<8x8xf32>
      %40 = arith.addf %38, %39 : vector<8x8xf32>
      %c0_23 = arith.constant 0 : index
      %c0_24 = arith.constant 0 : index
      %41 = vector.load %arg4[%c0_23, %c0_24] : memref<8x8xf32, #tpu.memory_space<vmem>>, vector<8x8xf32>
      %cst_25 = arith.constant 2.000000e+00 : f32
      %42 = vector.broadcast %cst_25 : f32 to vector<8x8xf32>
      %43 = arith.mulf %42, %41 : vector<8x8xf32>
      %44 = arith.subf %40, %43 : vector<8x8xf32>
      %cst_26 = arith.constant 0.000000e+00 : f32
      %45 = vector.broadcast %cst_26 : f32 to vector<8x8xf32>
      %46 = arith.maximumf %44, %45 : vector<8x8xf32>
      %cst_27 = arith.constant 9.765625E-4 : f32
      %47 = vector.broadcast %cst_27 : f32 to vector<8x8xf32>
      %48 = arith.mulf %46, %47 : vector<8x8xf32>
      %cst_28 = arith.constant 0.000000e+00 : f32
      %49 = vector.broadcast %cst_28 : f32 to vector<8x8xf32>
      %50 = arith.subf %49, %34 : vector<8x8xf32>
      %51 = arith.mulf %50, %48 : vector<8x8xf32>
      %52 = vector.shape_cast %51 : vector<8x8xf32> to vector<1x8x8xf32>
      %cst_29 = arith.constant dense<0.000000e+00> : vector<1xf32>
      %53 = vector.multi_reduction <add>, %52, %cst_29 [1, 2] : vector<1x8x8xf32> to vector<1xf32>
      %54 = vector.shape_cast %53 : vector<1xf32> to vector<1x1x1xf32>
      %55 = vector.extract %54[0, 0, 0] : f32 from vector<1x1x1xf32>
      %cst_30 = arith.constant 1.562500e-02 : f32
      %56 = arith.mulf %55, %cst_30 : f32
      %57 = math.exp %56 : f32
      %58 = vector.broadcast %57 : f32 to vector<1x1xf32>
      %c0_31 = arith.constant 0 : index
      %c0_32 = arith.constant 0 : index
      %59 = vector.load %arg3[%c0_31, %c0_32] : memref<1x1xf32, #tpu.memory_space<vmem>>, vector<1x1xf32>
      tpu.vector_store %arg3[%c0_31, %c0_32], %58 {strides = array<i32>} : memref<1x1xf32, #tpu.memory_space<vmem>>, vector<1x1xf32>,
    } else {
    }
    return
  }
  func.func @transform_0(%arg0: i32) -> (i32, i32) {
    %c0_i32 = arith.constant 0 : i32
    %c0_i32_0 = arith.constant 0 : i32
    %c0_i32_1 = arith.constant 0 : i32
    return %c0_i32, %c0_i32_0 : i32, i32
  }
  func.func @transform_1(%arg0: i32) -> (i32, i32) {
    %c0_i32 = arith.constant 0 : i32
    %c0_i32_0 = arith.constant 0 : i32
    return %c0_i32, %arg0 : i32, i32
  }
  func.func @transform_2(%arg0: i32) -> (i32, i32) {
    %c0_i32 = arith.constant 0 : i32
    %c0_i32_0 = arith.constant 0 : i32
    %c0_i32_1 = arith.constant 0 : i32
    return %c0_i32, %c0_i32_0 : i32, i32
  }
}

</mosaic_0001>

<llo_original>
// kernel: tpu_custom_call.1
$region0: #{tpu_custom_call.1}
  #allocation0 [shape = 'u32[]', space=smem, size = 0x4, offset = 0x4, fixed_abs, tag = 'smem constant byte address 0x4 - core index']
  #allocation1 [shape = 'u32[72,128]{1,0:T(1,128)}', space=vmem, size = 0x9000, scoped, tag = 'internal scratch']
  #allocation2 [shape = 'f32[8,8]{1,0:T(8,128)}', space=vmem, size = 0x1000, scoped, tag = 'scratch operand']
  #allocation3 [shape = 'f32[8,1]{1,0:T(8,128)}', space=vmem, size = 0x1000, scoped, tag = 'scratch operand']
  %s0 = inlined_call_operand.hbm [shape: f32[8,32], index: 0, kind: input, shape index: {}]
  %s1 = inlined_call_operand.hbm [shape: f32[8,1024], index: 1, kind: input, shape index: {}]
  %s2 = inlined_call_operand.hbm [shape: f32[1,1], index: 2, kind: output, shape index: {}]
  %s3 = sld [smem:[#allocation0]]
  $region57: #{tpu_custom_call.1} parent=0
    _
  %s5 = ssub.s32 1, %s3
  %s6 = scalar_select 0, %s5, %s3
  $region1: #{tpu_custom_call.1} parent=0
    #allocation4 [shape = 'u8[4096]{0}', space=vmem, size = 0x1000, scoped, tag = 'input window, operand 0, single buffered']
    #allocation5 [shape = 's32[2]{0}', space=sflag, size = 0x8, scoped, tag = 'scoped memory for tpu_custom_call.1']
    #allocation6 [shape = 's32[2]{0}', space=sflag, size = 0x8, scoped, tag = 'scoped memory for tpu_custom_call.1']
    #allocation7 [shape = 'u8[32768]{0}', space=vmem, size = 0x8000, scoped, tag = 'input window, operand 1']
    #allocation8 [shape = 's32[2]{0}', space=sflag, size = 0x8, scoped, tag = 'scoped memory for tpu_custom_call.1']
    #allocation9 [shape = 'u8[512]{0}', space=vmem, size = 0x400, scoped, tag = 'output window, operand 0, single buffered']
    %7 = vsyncpa [#allocation5], 0
    %8 = vsyncpa [#allocation8], 0
    %s9 = scalar_lea.sflag [#allocation8], 1
    %10 = vsyncpa %s9, 0
    %11 = vsyncpa [#allocation6], 0
    loop: start=0, step=1, limit=4
    $region2: #{tpu_custom_call.1} parent=1 // loop_pre_header
      _
    $region3: #{tpu_custom_call.1} parent=1 // loop_header
      %s13 = sphi 0, %s17
      %p14 = scmp.ge.s32.totalorder %s13, 4
      %s21 = sphi 0, %s21
      %s23 = sphi 0, %s21
      %s24 = sphi 0, %s23
      %s38 = sphi 0, %s24
      %s44 = sphi 0, %s46
      %s47 = sphi 0, %s44
      %s48 = sphi 0, %s47
      %s64 = sphi 0, %s48
      %s68 = sphi 0, %s68
      %s70 = sphi 0, %s68
      %s71 = sphi 0, %s70
      %s85 = sphi 0, %s71
    $region4: #{tpu_custom_call.1} parent=1 // loop_header_branch
      %16 = sbr.rel (%p14) target = $region8
    $region5: #{tpu_custom_call.1} parent=1 // loop_body
      %s18 = ssub.s32 %s13, 1
      %s19 = ssub.s32 %s13, 2
      %s20 = sadd.s32 %s13, 1
      %s22 = sadd.s32 %s21, 1
      %p25 = scmp.eq.s32.totalorder %s13, 1
      %p26 = scmp.ne.s32.totalorder %s21, %s23
      %p27 = scmp.eq.s32.totalorder %s13, 0
      %p28 = por %p26, %p27
      %p29 = scmp.ne.s32.totalorder %s21, %s23
      %p30 = scmp.eq.s32.totalorder %s18, 1
      %p31 = por %p29, %p30
      %p32 = scmp.ne.s32.totalorder %s23, %s24
      %p33 = scmp.eq.s32.totalorder %s18, 0
      %p34 = por %p32, %p33
      %p35 = scmp.ne.s32.totalorder %s23, %s24
      %p36 = scmp.eq.s32.totalorder %s19, 1
      %p37 = por %p35, %p36
      %p39 = scmp.ne.s32.totalorder %s24, %s38
      %p40 = scmp.eq.s32.totalorder %s19, 0
      %p41 = por %p39, %p40
      %s42 = ssub.s32 %s13, %s20
      %p43 = scmp.eq.s32.totalorder %s42, 0
      %s45 = sadd.s32 %s44, 1
      %s46 = scalar_select %p43, %s44, %s45
      %p49 = pneg %p43
      %p50 = scmp.eq.s32.totalorder %s13, 1
      %p51 = por %p49, %p50
      %p52 = scmp.ne.s32.totalorder %s44, %s47
      %p53 = scmp.eq.s32.totalorder %s13, 0
      %p54 = por %p52, %p53
      %p55 = scmp.ne.s32.totalorder %s44, %s47
      %p56 = scmp.eq.s32.totalorder %s18, 1
      %p57 = por %p55, %p56
      %p58 = scmp.ne.s32.totalorder %s47, %s48
      %p59 = scmp.eq.s32.totalorder %s18, 0
      %p60 = por %p58, %p59
      %p61 = scmp.ne.s32.totalorder %s47, %s48
      %p62 = scmp.eq.s32.totalorder %s19, 1
      %p63 = por %p61, %p62
      %p65 = scmp.ne.s32.totalorder %s48, %s64
      %p66 = scmp.eq.s32.totalorder %s19, 0
      %p67 = por %p65, %p66
      %s69 = sadd.s32 %s68, 1
      %p72 = scmp.eq.s32.totalorder %s13, 1
      %p73 = scmp.ne.s32.totalorder %s68, %s70
      %p74 = scmp.eq.s32.totalorder %s13, 0
      %p75 = por %p73, %p74
      %p76 = scmp.ne.s32.totalorder %s68, %s70
      %p77 = scmp.eq.s32.totalorder %s18, 1
      %p78 = por %p76, %p77
      %p79 = scmp.ne.s32.totalorder %s70, %s71
      %p80 = scmp.eq.s32.totalorder %s18, 0
      %p81 = por %p79, %p80
      %p82 = scmp.ne.s32.totalorder %s70, %s71
      %p83 = scmp.eq.s32.totalorder %s19, 1
      %p84 = por %p82, %p83
      %p86 = scmp.ne.s32.totalorder %s71, %s85
      %p87 = scmp.eq.s32.totalorder %s19, 0
      %p88 = por %p86, %p87
      %p89 = scmp.le.s32.totalorder 1, %s13
      %p90 = scmp.lt.s32.totalorder %s13, 3
      %p91 = pnand %p89, %p90
      %p92 = pneg %p91
      // Predicated region
      $region9: #{tpu_custom_call.1} parent=5 // pred_check
        _
      $region10: #{tpu_custom_call.1} parent=5 // pred_check_branch
        %94 = sbr.rel (%p91) target = $region12
      $region11: #{tpu_custom_call.1} parent=5 // pred_region
        %s95 = ssub.s32 %s13, 1
        // Predicated region
        $region13: #{tpu_custom_call.1} parent=11 // pred_check
          %p96 = pneg %p34
        $region14: #{tpu_custom_call.1} parent=11 // pred_check_branch
          %98 = sbr.rel (%p96) target = $region16
        $region15: #{tpu_custom_call.1} parent=11 // pred_region
          %100 = vsyncadd [#allocation5], 0
          %s102 = sshll.u32 %s0, 4
          %s103 = int_to_ptr.hbm [resolvable:$true] %s102
          %s104 = sshll.u32 [#allocation4], 4
          %s105 = int_to_ptr.vmem [resolvable:$true] %s104
          %107 = dma.hbm_to_vmem [thread:$0]  %s103, 128, %s105, [#allocation5]
        $region16: #{tpu_custom_call.1} parent=11 // pred_fallthru
          _
      $region12: #{tpu_custom_call.1} parent=5 // pred_fallthru
        _
      %p108 = scmp.lt.s32.totalorder %s13, 2
      // Predicated region
      $region17: #{tpu_custom_call.1} parent=5 // pred_check
        %p109 = pneg %p108
      $region18: #{tpu_custom_call.1} parent=5 // pred_check_branch
        %111 = sbr.rel (%p109) target = $region20
      $region19: #{tpu_custom_call.1} parent=5 // pred_region
        // Predicated region
        $region21: #{tpu_custom_call.1} parent=19 // pred_check
          %p112 = pneg %p54
        $region22: #{tpu_custom_call.1} parent=19 // pred_check_branch
          %114 = sbr.rel (%p112) target = $region24
        $region23: #{tpu_custom_call.1} parent=19 // pred_region
          %s115 = sand.u32 %s44, 1
          %s116 = scalar_lea.sflag [#allocation8], %s115
          %s117 = sand.u32 %s44, 1
          %s118 = smul.addr %s117, 32
          %s119 = scalar_lea.vmem [#allocation7], %s118
          %s120 = smul.u32 4, %s13
          %122 = vsyncadd %s116, 0
          %s123 = smul.addr %s120, 8
          %s124 = scalar_lea.hbm %s1, %s123
          %s126 = sshll.u32 %s124, 4
          %s127 = int_to_ptr.hbm [resolvable:$true] %s126
          %s128 = sshll.u32 %s119, 4
          %s129 = int_to_ptr.vmem [resolvable:$true] %s128
          %131 = dma.hbm_to_vmem [thread:$0]  %s127, 512, %s129, %s116
        $region24: #{tpu_custom_call.1} parent=19 // pred_fallthru
          _
      $region20: #{tpu_custom_call.1} parent=5 // pred_fallthru
        _
      %p132 = scmp.le.s32.totalorder 1, %s13
      %p133 = scmp.lt.s32.totalorder %s13, 3
      %p134 = pnand %p132, %p133
      %p135 = pneg %p134
      // Predicated region
      $region25: #{tpu_custom_call.1} parent=5 // pred_check
        _
      $region26: #{tpu_custom_call.1} parent=5 // pred_check_branch
        %137 = sbr.rel (%p134) target = $region28
      $region27: #{tpu_custom_call.1} parent=5 // pred_region
        %s138 = ssub.s32 %s13, 1
        // Predicated region
        $region29: #{tpu_custom_call.1} parent=27 // pred_check
          %p139 = pneg %p34
        $region30: #{tpu_custom_call.1} parent=27 // pred_check_branch
          %141 = sbr.rel (%p139) target = $region32
        $region31: #{tpu_custom_call.1} parent=27 // pred_region
          %143 = dma.done [#allocation5], 128
        $region32: #{tpu_custom_call.1} parent=27 // pred_fallthru
          _
        %s144 = sand.u32 %s47, 1
        %s145 = scalar_lea.sflag [#allocation8], %s144
        %s146 = sand.u32 %s47, 1
        %s147 = smul.addr %s146, 32
        %s148 = scalar_lea.vmem [#allocation7], %s147
        // Predicated region
        $region33: #{tpu_custom_call.1} parent=27 // pred_check
          %p149 = pneg %p60
        $region34: #{tpu_custom_call.1} parent=27 // pred_check_branch
          %151 = sbr.rel (%p149) target = $region36
        $region35: #{tpu_custom_call.1} parent=27 // pred_region
          %153 = dma.done %s145, 512
        $region36: #{tpu_custom_call.1} parent=27 // pred_fallthru
          _
        %p154 = pneg %p34
        %p155 = pneg %p31
        %s156 = sand.u32 %s47, 1
        %s157 = scalar_lea.sflag [#allocation8], %s156
        %s158 = sand.u32 %s47, 1
        %s159 = smul.addr %s158, 32
        %s160 = scalar_lea.vmem [#allocation7], %s159
        %p161 = pneg %p60
        %p162 = pneg %p57
        %p163 = pneg %p81
        %p164 = pneg %p78
        %s165 = smul.u32 4, %s18
        %p166 = scmp.eq.s32.totalorder %s18, 0
        // Predicated region
        $region37: #{tpu_custom_call.1} parent=27 // pred_check
          %p167 = pneg %p166
        $region38: #{tpu_custom_call.1} parent=27 // pred_check_branch
          %169 = sbr.rel (%p167) target = $region40
        $region39: #{tpu_custom_call.1} parent=27 // pred_region
          %vm170 = vcmask 64512
          %171 = vst.msk [vmem:[#allocation2] sm:$0xff] %vm170, 0.0
          %vm172 = vcmask 7168
          %173 = vst.msk [vmem:[#allocation3] sm:$0xff] %vm172, 0.0
        $region40: #{tpu_custom_call.1} parent=27 // pred_fallthru
          _
        %v174 = vld [vmem:[%s148] sm:$0xff]
        %v175 = vld [vmem:[%s148 + $0x8] sm:$0xff]
        %v176 = vld [vmem:[%s148 + $0x10] sm:$0xff]
        %v177 = vld [vmem:[%s148 + $0x18] sm:$0xff]
        %v178 = vld [vmem:[#allocation2] sm:$0xff]
        %179 = vmatpush.xpose.msra.mxu0 0.0
        %180 = vmatpush.xpose.msra.mxu0 0.0
        %181 = vmatpush.xpose.msra.mxu0 0.0
        %182 = vmatpush.xpose.msra.mxu0 0.0
        %183 = vmatpush.xpose.msra.mxu0 0.0
        %184 = vmatpush.xpose.msra.mxu0 0.0
        %185 = vmatpush.xpose.msra.mxu0 0.0
        %186 = vmatpush.xpose.msra.mxu0 0.0
        %187 = vmatpush.xpose.msra.mxu0 0.0
        %188 = vmatpush.xpose.msra.mxu0 0.0
        %189 = vmatpush.xpose.msra.mxu0 0.0
        %190 = vmatpush.xpose.msra.mxu0 0.0
        %191 = vmatpush.xpose.msra.mxu0 0.0
        %192 = vmatpush.xpose.msra.mxu0 0.0
        %193 = vmatpush.xpose.msra.mxu0 0.0
        %194 = vmatpush.xpose.msra.mxu0 %v174
        %195 = vmatmul.f32.gmra.mxu0 %v174
        %v196 = vpop.f32.mrf.mxu0
        %v197 = vadd.f32 0.0, %v196
        %198 = vdwg.mxu0
        %199 = vmatpush.xpose.msra.mxu0 0.0
        %200 = vmatpush.xpose.msra.mxu0 0.0
        %201 = vmatpush.xpose.msra.mxu0 0.0
        %202 = vmatpush.xpose.msra.mxu0 0.0
        %203 = vmatpush.xpose.msra.mxu0 0.0
        %204 = vmatpush.xpose.msra.mxu0 0.0
        %205 = vmatpush.xpose.msra.mxu0 0.0
        %206 = vmatpush.xpose.msra.mxu0 0.0
        %207 = vmatpush.xpose.msra.mxu0 0.0
        %208 = vmatpush.xpose.msra.mxu0 0.0
        %209 = vmatpush.xpose.msra.mxu0 0.0
        %210 = vmatpush.xpose.msra.mxu0 0.0
        %211 = vmatpush.xpose.msra.mxu0 0.0
        %212 = vmatpush.xpose.msra.mxu0 0.0
        %213 = vmatpush.xpose.msra.mxu0 0.0
        %214 = vmatpush.xpose.msra.mxu0 %v175
        %215 = vmatmul.f32.gmra.mxu0 %v175
        %v216 = vpop.f32.mrf.mxu0
        %v217 = vadd.f32 %v197, %v216
        %218 = vdwg.mxu0
        %219 = vmatpush.xpose.msra.mxu0 0.0
        %220 = vmatpush.xpose.msra.mxu0 0.0
        %221 = vmatpush.xpose.msra.mxu0 0.0
        %222 = vmatpush.xpose.msra.mxu0 0.0
        %223 = vmatpush.xpose.msra.mxu0 0.0
        %224 = vmatpush.xpose.msra.mxu0 0.0
        %225 = vmatpush.xpose.msra.mxu0 0.0
        %226 = vmatpush.xpose.msra.mxu0 0.0
        %227 = vmatpush.xpose.msra.mxu0 0.0
        %228 = vmatpush.xpose.msra.mxu0 0.0
        %229 = vmatpush.xpose.msra.mxu0 0.0
        %230 = vmatpush.xpose.msra.mxu0 0.0
        %231 = vmatpush.xpose.msra.mxu0 0.0
        %232 = vmatpush.xpose.msra.mxu0 0.0
        %233 = vmatpush.xpose.msra.mxu0 0.0
        %234 = vmatpush.xpose.msra.mxu0 %v176
        %235 = vmatmul.f32.gmra.mxu0 %v176
        %v236 = vpop.f32.mrf.mxu0
        %v237 = vadd.f32 %v217, %v236
        %238 = vdwg.mxu0
        %239 = vmatpush.xpose.msra.mxu0 0.0
        %240 = vmatpush.xpose.msra.mxu0 0.0
        %241 = vmatpush.xpose.msra.mxu0 0.0
        %242 = vmatpush.xpose.msra.mxu0 0.0
        %243 = vmatpush.xpose.msra.mxu0 0.0
        %244 = vmatpush.xpose.msra.mxu0 0.0
        %245 = vmatpush.xpose.msra.mxu0 0.0
        %246 = vmatpush.xpose.msra.mxu0 0.0
        %247 = vmatpush.xpose.msra.mxu0 0.0
        %248 = vmatpush.xpose.msra.mxu0 0.0
        %249 = vmatpush.xpose.msra.mxu0 0.0
        %250 = vmatpush.xpose.msra.mxu0 0.0
        %251 = vmatpush.xpose.msra.mxu0 0.0
        %252 = vmatpush.xpose.msra.mxu0 0.0
        %253 = vmatpush.xpose.msra.mxu0 0.0
        %254 = vmatpush.xpose.msra.mxu0 %v177
        %255 = vmatmul.f32.gmra.mxu0 %v177
        %v256 = vpop.f32.mrf.mxu0
        %v257 = vadd.f32 %v237, %v256
        %258 = vdwg.mxu0
        %v259 = vadd.f32 %v178, %v257
        %vm260 = vcmask 64512
        %261 = vst.msk [vmem:[#allocation2] sm:$0xff] %vm260, %v259
        %v262 = vld [vmem:[#allocation3] sm:$0xff]
        %v263 = vmul.f32 %v174, %v174
        %v264 = vmul.f32 %v175, %v175
        %v265 = vmul.f32 %v176, %v176
        %v266 = vmul.f32 %v177, %v177
        %v267 = vadd.f32 %v263, %v264
        %v268 = vadd.f32 %v267, %v265
        %v269 = vadd.f32 %v268, %v266
        %270 = vadd.xlane.f32.xlu0 %v269
        %v271 = vpop.xlane.xlu0 %270
        %v272 = vadd.f32 %v262, %v271
        %vm273 = vcmask 7168
        %274 = vst.msk [vmem:[#allocation3] sm:$0xff] %vm273, %v272
        %p275 = scmp.eq.s32.totalorder %s18, 1
        // Predicated region
        $region41: #{tpu_custom_call.1} parent=27 // pred_check
          %p276 = pneg %p275
        $region42: #{tpu_custom_call.1} parent=27 // pred_check_branch
          %278 = sbr.rel (%p276) target = $region44
        $region43: #{tpu_custom_call.1} parent=27 // pred_region
          %v279 = vld [vmem:[#allocation4] sm:$0xff]
          %vm280 = vcmask 261120
          %v282 = vsel %vm280, %v279, 0
          %284 = vmatpush.xpose.msra.mxu0 0.0
          %285 = vmatpush.xpose.msra.mxu0 0.0
          %286 = vmatpush.xpose.msra.mxu0 0.0
          %287 = vmatpush.xpose.msra.mxu0 0.0
          %288 = vmatpush.xpose.msra.mxu0 0.0
          %289 = vmatpush.xpose.msra.mxu0 0.0
          %290 = vmatpush.xpose.msra.mxu0 0.0
          %291 = vmatpush.xpose.msra.mxu0 0.0
          %292 = vmatpush.xpose.msra.mxu0 0.0
          %293 = vmatpush.xpose.msra.mxu0 0.0
          %294 = vmatpush.xpose.msra.mxu0 0.0
          %295 = vmatpush.xpose.msra.mxu0 0.0
          %296 = vmatpush.xpose.msra.mxu0 0.0
          %297 = vmatpush.xpose.msra.mxu0 0.0
          %298 = vmatpush.xpose.msra.mxu0 0.0
          %299 = vmatpush.xpose.msra.mxu0 %v282
          %300 = vmatmul.f32.gmra.mxu0 %v282
          %v301 = vpop.f32.mrf.mxu0
          %v302 = vadd.f32 0.0, %v301
          %303 = vdwg.mxu0
          %v304 = vmul.f32 %v279, %v279
          %v305 = vsel %vm280, %v304, 0.0
          %306 = vadd.xlane.f32.xlu0 %v305
          %v307 = vpop.xlane.xlu0 %306
          %308 = vxpose.xlu0.b32.start [1/16] %v307, 128
          %309 = vxpose.xlu0.b32.cont [2/16] 0.0, 128
          %310 = vxpose.xlu0.b32.cont [3/16] 0.0, 128
          %311 = vxpose.xlu0.b32.cont [4/16] 0.0, 128
          %312 = vxpose.xlu0.b32.cont [5/16] 0.0, 128
          %313 = vxpose.xlu0.b32.cont [6/16] 0.0, 128
          %314 = vxpose.xlu0.b32.cont [7/16] 0.0, 128
          %315 = vxpose.xlu0.b32.cont [8/16] 0.0, 128
          %316 = vxpose.xlu0.b32.cont [9/16] 0.0, 128
          %317 = vxpose.xlu0.b32.cont [10/16] 0.0, 128
          %318 = vxpose.xlu0.b32.cont [11/16] 0.0, 128
          %319 = vxpose.xlu0.b32.cont [12/16] 0.0, 128
          %320 = vxpose.xlu0.b32.cont [13/16] 0.0, 128
          %321 = vxpose.xlu0.b32.cont [14/16] 0.0, 128
          %322 = vxpose.xlu0.b32.cont [15/16] 0.0, 128
          %323 = vxpose.xlu0.b32.end [16/16] 0.0, 128
          %v324 = vpop.trf.xlu0
          %v325 = vpop.trf.xlu0
          %v326 = vpop.trf.xlu0
          %v327 = vpop.trf.xlu0
          %v328 = vpop.trf.xlu0
          %v329 = vpop.trf.xlu0
          %v330 = vpop.trf.xlu0
          %v331 = vpop.trf.xlu0
          %v332 = vpop.trf.xlu0
          %v333 = vpop.trf.xlu0
          %v334 = vpop.trf.xlu0
          %v335 = vpop.trf.xlu0
          %v336 = vpop.trf.xlu0
          %v337 = vpop.trf.xlu0
          %v338 = vpop.trf.xlu0
          %v339 = vpop.trf.xlu0
          %v340 = vperm.slane %v324, 0
          %v341 = vadd.f32 %v307, %v340
          %v342 = vmul.f32 %v302, 2.0
          %v343 = vsub.f32 %v341, %v342
          %v344 = vmax.f32 %v343, 0.0
          %v345 = vmul.f32 %v344, 0.03125
          %v346 = vld [vmem:[#allocation3] sm:$0xff]
          %347 = vxpose.xlu0.b32.start [1/16] %v346, 128
          %348 = vxpose.xlu0.b32.cont [2/16] 0.0, 128
          %349 = vxpose.xlu0.b32.cont [3/16] 0.0, 128
          %350 = vxpose.xlu0.b32.cont [4/16] 0.0, 128
          %351 = vxpose.xlu0.b32.cont [5/16] 0.0, 128
          %352 = vxpose.xlu0.b32.cont [6/16] 0.0, 128
          %353 = vxpose.xlu0.b32.cont [7/16] 0.0, 128
          %354 = vxpose.xlu0.b32.cont [8/16] 0.0, 128
          %355 = vxpose.xlu0.b32.cont [9/16] 0.0, 128
          %356 = vxpose.xlu0.b32.cont [10/16] 0.0, 128
          %357 = vxpose.xlu0.b32.cont [11/16] 0.0, 128
          %358 = vxpose.xlu0.b32.cont [12/16] 0.0, 128
          %359 = vxpose.xlu0.b32.cont [13/16] 0.0, 128
          %360 = vxpose.xlu0.b32.cont [14/16] 0.0, 128
          %361 = vxpose.xlu0.b32.cont [15/16] 0.0, 128
          %362 = vxpose.xlu0.b32.end [16/16] 0.0, 128
          %v363 = vpop.trf.xlu0
          %v364 = vpop.trf.xlu0
          %v365 = vpop.trf.xlu0
          %v366 = vpop.trf.xlu0
          %v367 = vpop.trf.xlu0
          %v368 = vpop.trf.xlu0
          %v369 = vpop.trf.xlu0
          %v370 = vpop.trf.xlu0
          %v371 = vpop.trf.xlu0
          %v372 = vpop.trf.xlu0
          %v373 = vpop.trf.xlu0
          %v374 = vpop.trf.xlu0
          %v375 = vpop.trf.xlu0
          %v376 = vpop.trf.xlu0
          %v377 = vpop.trf.xlu0
          %v378 = vpop.trf.xlu0
          %380 = vset.pattern.permute.xlu0 0
          %381 = vperm.xlu0 %380, %v346
          %v382 = vpop.permute.xlu0 %381
          %v384 = vperm.slane %v363, 0
          %v385 = vadd.f32 %v382, %v384
          %v386 = vld [vmem:[#allocation2] sm:$0xff]
          %v387 = vmul.f32 %v386, 2.0
          %v388 = vsub.f32 %v385, %v387
          %v389 = vmax.f32 %v388, 0.0
          %v390 = vmul.f32 %v389, 0.0009765625
          %v391 = vsub.f32 0.0, %v345
          %v392 = vmul.f32 %v391, %v390
          %v393 = vsel %vm260, %v392, 0.0
          %394 = vadd.xlane.f32.xlu0 %v393
          %v395 = vpop.xlane.xlu0 %394
          %v396 = vrot.slane %v395, 4
          %v397 = vadd.f32 %v395, %v396
          %v398 = vrot.slane %v397, 2
          %v399 = vadd.f32 %v397, %v398
          %v400 = vrot.slane %v399, 1
          %v401 = vadd.f32 %v399, %v400
          %s402 = vtos %v401
          %s403 = smul.f32 %s402, 0.015625
          %v404 = vstv %s403
          %v405 = vmul.f32 %v404, 1.442695
          %v406 = vpow.pop %v405
          %s407 = vtos %v406
          %v408 = vstv %s407
          %vm409 = vcmask 0
          %410 = vst.msk [vmem:[#allocation9] sm:$0x1] %vm409, %v408
        $region44: #{tpu_custom_call.1} parent=27 // pred_fallthru
          _
        // Predicated region
        $region45: #{tpu_custom_call.1} parent=27 // pred_check
          %p411 = pneg %p78
        $region46: #{tpu_custom_call.1} parent=27 // pred_check_branch
          %413 = sbr.rel (%p411) target = $region48
        $region47: #{tpu_custom_call.1} parent=27 // pred_region
          %415 = vsyncadd [#allocation6], 0
          %s417 = sshll.u32 [#allocation9], 4
          %s418 = int_to_ptr.vmem [resolvable:$true] %s417
          %s419 = sshll.u32 %s2, 4
          %s420 = int_to_ptr.hbm [resolvable:$true] %s419
          %422 = dma.vmem_to_hbm [thread:$0]  %s418, 16, %s420, [#allocation6]
        $region48: #{tpu_custom_call.1} parent=27 // pred_fallthru
          _
        // Predicated region
        $region49: #{tpu_custom_call.1} parent=27 // pred_check
          %p423 = pneg %p78
        $region50: #{tpu_custom_call.1} parent=27 // pred_check_branch
          %425 = sbr.rel (%p423) target = $region52
        $region51: #{tpu_custom_call.1} parent=27 // pred_region
          %427 = dma.done [#allocation6], 16
        $region52: #{tpu_custom_call.1} parent=27 // pred_fallthru
          _
      $region28: #{tpu_custom_call.1} parent=5 // pred_fallthru
        _
      %p428 = scmp.le.s32.totalorder 2, %s13
      // Predicated region
      $region53: #{tpu_custom_call.1} parent=5 // pred_check
        %p429 = pneg %p428
      $region54: #{tpu_custom_call.1} parent=5 // pred_check_branch
        %431 = sbr.rel (%p429) target = $region56
      $region55: #{tpu_custom_call.1} parent=5 // pred_region
        %s432 = ssub.s32 %s13, 2
      $region56: #{tpu_custom_call.1} parent=5 // pred_fallthru
        _
    $region6: #{tpu_custom_call.1} parent=1 // loop_footer
      %s17 = sadd.s32 1, %s13
    $region7: #{tpu_custom_call.1} parent=1 // loop_footer_branch
      %12 = sbr.rel target = $region3
    $region8: #{tpu_custom_call.1} parent=1 // loop_exit
      _
    %433 = vsyncpa [#allocation5], 1
    %s434 = scalar_lea.sflag [#allocation5], 1
    %435 = vsyncpa %s434, 1
    %436 = vsyncpa [#allocation8], 1
    %s437 = scalar_lea.sflag [#allocation8], 1
    %438 = vsyncpa %s437, 1
    %439 = vsyncpa [#allocation6], 1
    %s440 = scalar_lea.sflag [#allocation6], 1
    %441 = vsyncpa %s440, 1

</llo_original>
